<compile_context>
chip_gen: v6e
topology: v6e:2x2x1
jax: 0.10.0
libtpu: 0.0.40
codegen_flags: <defaults>
</compile_context>

<pallas_src>
import functools

import jax
import jax.numpy as jnp
from jax import lax
from jax.experimental import pallas as pl
from jax.experimental.pallas import tpu as pltpu

LANES = 128
ACC_ROWS = 8            # one f32 vreg worth of sublanes


def _round_up(x, m):
    return (x + m - 1) // m * m


def _is_v7x():
    """Best-effort detection of a 2-TensorCore (v7x-class) chip."""
    try:
        kind = jax.devices()[0].device_kind.lower()
    except Exception:
        kind = ""
    return ("v7" in kind) or ("7x" in kind)


def _mse_partial_kernel(x_ref, y_ref, o_ref, *, rows, block_rows, inner_steps,
                        num_blocks, needs_mask, split):
    """Accumulate sum((x-y)^2) of this block into the resident (8,128) output."""
    if split:
        p = pl.program_id(0)
        i = pl.program_id(1)
        step = p * inner_steps + i
    else:
        i = pl.program_id(0)
        step = i

    # Output block is resident across the inner ("arbitrary") reduction axis.
    @pl.when(i == 0)
    def _():
        o_ref[...] = jnp.zeros_like(o_ref)

    def accumulate(masked):
        x = x_ref[...].astype(jnp.float32)
        y = y_ref[...].astype(jnp.float32)
        d = x - y
        sq = d * d
        if masked:
            # Rows at/after `rows` are out-of-bounds garbage in the last
            # (partial) block.  Must stay a select (where), not a multiply:
            # Inf*0 / NaN*0 would poison the accumulator.
            row_ids = step * block_rows + lax.broadcasted_iota(
                jnp.int32, (block_rows, LANES), 0)
            sq = jnp.where(row_ids < rows, sq, jnp.float32(0.0))
        # Lane-parallel accumulation: fold 8-row groups with VPU adds only.
        o_ref[...] += sq.reshape(block_rows // ACC_ROWS, ACC_ROWS, LANES).sum(axis=0)

    last = num_blocks - 1
    if needs_mask:
        @pl.when(step < last)
        def _():
            accumulate(False)

        @pl.when(step == last)
        def _():
            accumulate(True)
    else:
        if split:
            # Skip the (at most one) clamped padding step when num_blocks is
            # not a multiple of the split count.
            @pl.when(step < num_blocks)
            def _():
                accumulate(False)
        else:
            accumulate(False)


def l2_loss(stu_preds, tea_preds):
    """MSE with mean reduction, matching nn.MSELoss(reduction='mean')."""
    assert stu_preds.shape == tea_preds.shape
    n_elems = stu_preds.size
    assert n_elems > 0

    x = stu_preds.reshape(-1)
    y = tea_preds.reshape(-1)

    rows = n_elems // LANES
    aligned = rows * LANES

    # Sub-128 tail handled in plain JAX (at most 127 elements): avoids the
    # full-tensor jnp.pad HBM copy of BOTH inputs on the ragged path.
    tail_sum = jnp.float32(0.0)
    if aligned < n_elems:
        xt = x[aligned:].astype(jnp.float32)
        yt = y[aligned:].astype(jnp.float32)
        dt = xt - yt
        tail_sum = jnp.sum(dt * dt)

    if rows == 0:
        total = tail_sum
    else:
        if aligned == n_elems:
            x2 = x.reshape(rows, LANES)
            y2 = y.reshape(rows, LANES)
        else:
            x2 = x[:aligned].reshape(rows, LANES)
            y2 = y[:aligned].reshape(rows, LANES)

        # Generation-aware split / tile size.
        is_v7 = _is_v7x()
        n_split = 2 if is_v7 else 1
        max_tile_rows = 4096 if is_v7 else 2048

        # Sublane packing multiple for the input dtype (f32: 8, bf16: 16, i8: 32).
        itemsize = jnp.dtype(stu_preds.dtype).itemsize
        pack = 8 * max(1, 4 // max(1, itemsize))
        block_rows = min(max_tile_rows, _round_up(rows, pack))
        num_blocks = pl.cdiv(rows, block_rows)
        inner_steps = pl.cdiv(num_blocks, n_split)
        needs_mask = (rows % block_rows) != 0

        kernel = functools.partial(
            _mse_partial_kernel, rows=rows, block_rows=block_rows,
            inner_steps=inner_steps, num_blocks=num_blocks,
            needs_mask=needs_mask, split=(n_split > 1))

        if n_split > 1:
            grid = (n_split, inner_steps)

            def in_map(p, i):
                # Clamp so the (at most one) padding step still maps to a valid
                # block; its contribution is discarded by the in-kernel guard.
                return (jnp.minimum(p * inner_steps + i, num_blocks - 1), 0)

            out_spec = pl.BlockSpec((ACC_ROWS, LANES), lambda p, i: (p, 0))
            core_sem = getattr(pltpu, "CORE_PARALLEL", "parallel")
            dim_sem = (core_sem, "arbitrary")
        else:
            grid = (num_blocks,)

            def in_map(i):
                return (i, 0)

            out_spec = pl.BlockSpec((ACC_ROWS, LANES), lambda i: (0, 0))
            dim_sem = ("arbitrary",)

        partials = pl.pallas_call(
            kernel,
            out_shape=jax.ShapeDtypeStruct((n_split * ACC_ROWS, LANES),
                                           jnp.float32),
            grid_spec=pltpu.PrefetchScalarGridSpec(
                num_scalar_prefetch=0,
                grid=grid,
                in_specs=[
                    pl.BlockSpec((block_rows, LANES), in_map),
                    pl.BlockSpec((block_rows, LANES), in_map),
                ],
                out_specs=out_spec,
            ),
            compiler_params=pltpu.CompilerParams(dimension_semantics=dim_sem),
        )(x2, y2)

        total = jnp.sum(partials) + tail_sum   # single final cross-lane reduce

    mean = total / jnp.float32(n_elems)
    # Matches PyTorch MSELoss dtype semantics (loss in the input dtype).
    return mean.astype(stu_preds.dtype)


if __name__ == "__main__":
    key = jax.random.PRNGKey(0)
    k1, k2 = jax.random.split(key)

    # student / teacher predictions, NCHW-like shape (B, C, H, W)
    stu = jax.random.normal(k1, (2, 4, 16, 16), dtype=jnp.float32)
    tea = jax.random.normal(k2, (2, 4, 16, 16), dtype=jnp.float32)
    loss = l2_loss(stu, tea)
    jax.block_until_ready(loss)
    ref = jnp.mean((stu - tea) ** 2)
    assert jnp.allclose(loss, ref, rtol=1e-5, atol=1e-6), (loss, ref)

    # ragged secondary check: size not a multiple of 128 -> JAX tail + in-kernel
    # partial-last-block mask
    k3, k4 = jax.random.split(k2)
    stu2 = jax.random.normal(k3, (3, 5, 7, 11), dtype=jnp.float32)
    tea2 = jax.random.normal(k4, (3, 5, 7, 11), dtype=jnp.float32)
    loss2 = l2_loss(stu2, tea2)
    jax.block_until_ready(loss2)
    ref2 = jnp.mean((stu2 - tea2) ** 2)
    assert jnp.allclose(loss2, ref2, rtol=1e-5, atol=1e-6), (loss2, ref2)

    print("KERNEL_OK")
</pallas_src>

<mosaic_0001>
module attributes {stable_mosaic.version = 11 : i64} {
  func.func @_mse_partial_kernel(%arg0: i32, %arg1: memref<16x128xf32, #tpu.memory_space<vmem>>, %arg2: memref<16x128xf32, #tpu.memory_space<vmem>>, %arg3: memref<8x128xf32, #tpu.memory_space<vmem>>) attributes {dimension_semantics = [#tpu.dimension_semantics<arbitrary>], iteration_bounds = array<i64: 1>, scalar_prefetch = 0 : i64, scratch_operands = 0 : i64, tpu.core_type = #tpu.core_type<tc>, window_params = [{transform_indices = @transform_0, window_bounds = array<i64: 16, 128>}, {transform_indices = @transform_1, window_bounds = array<i64: 16, 128>}, {pipeline_mode = #tpu.pipeline_mode<synchronous>, transform_indices = @transform_2, window_bounds = array<i64: 8, 128>}]} {
    %c0_i32 = arith.constant 0 : i32
    %0 = arith.cmpi eq, %arg0, %c0_i32 : i32
    %1 = arith.extui %0 : i1 to i32
    %c0_i32_0 = arith.constant 0 : i32
    %2 = arith.cmpi ne, %1, %c0_i32_0 : i32
    scf.if %2 {
      %cst_8 = arith.constant 0.000000e+00 : f32
      %12 = vector.broadcast %cst_8 : f32 to vector<8x128xf32>
      %c0_9 = arith.constant 0 : index
      %c0_10 = arith.constant 0 : index
      %13 = vector.load %arg3[%c0_9, %c0_10] : memref<8x128xf32, #tpu.memory_space<vmem>>, vector<8x128xf32>
      tpu.vector_store %arg3[%c0_9, %c0_10], %12 {strides = array<i32>} : memref<8x128xf32, #tpu.memory_space<vmem>>, vector<8x128xf32>,
    } else {
    }
    %c0 = arith.constant 0 : index
    %c0_1 = arith.constant 0 : index
    %3 = vector.load %arg1[%c0, %c0_1] : memref<16x128xf32, #tpu.memory_space<vmem>>, vector<16x128xf32>
    %c0_2 = arith.constant 0 : index
    %c0_3 = arith.constant 0 : index
    %4 = vector.load %arg2[%c0_2, %c0_3] : memref<16x128xf32, #tpu.memory_space<vmem>>, vector<16x128xf32>
    %5 = arith.subf %3, %4 : vector<16x128xf32>
    %6 = arith.mulf %5, %5 : vector<16x128xf32>
    %c0_4 = arith.constant 0 : index
    %c0_5 = arith.constant 0 : index
    %7 = vector.load %arg3[%c0_4, %c0_5] : memref<8x128xf32, #tpu.memory_space<vmem>>, vector<8x128xf32>
    %8 = vector.shape_cast %6 : vector<16x128xf32> to vector<2x8x128xf32>
    %cst = arith.constant dense<0.000000e+00> : vector<8x128xf32>
    %9 = vector.multi_reduction <add>, %8, %cst [0] : vector<2x8x128xf32> to vector<8x128xf32>
    %10 = arith.addf %7, %9 : vector<8x128xf32>
    %c0_6 = arith.constant 0 : index
    %c0_7 = arith.constant 0 : index
    %11 = vector.load %arg3[%c0_6, %c0_7] : memref<8x128xf32, #tpu.memory_space<vmem>>, vector<8x128xf32>
    tpu.vector_store %arg3[%c0_6, %c0_7], %10 {strides = array<i32>} : memref<8x128xf32, #tpu.memory_space<vmem>>, vector<8x128xf32>,
    return
  }
  func.func @transform_0(%arg0: i32) -> (i32, i32) {
    %c0_i32 = arith.constant 0 : i32
    %c0_i32_0 = arith.constant 0 : i32
    return %arg0, %c0_i32 : i32, i32
  }
  func.func @transform_1(%arg0: i32) -> (i32, i32) {
    %c0_i32 = arith.constant 0 : i32
    %c0_i32_0 = arith.constant 0 : i32
    return %arg0, %c0_i32 : i32, i32
  }
  func.func @transform_2(%arg0: i32) -> (i32, i32) {
    %c0_i32 = arith.constant 0 : i32
    %c0_i32_0 = arith.constant 0 : i32
    %c0_i32_1 = arith.constant 0 : i32
    return %c0_i32, %c0_i32_0 : i32, i32
  }
}

</mosaic_0001>

<llo_original>
// kernel: tpu_custom_call.1
$region0: #{tpu_custom_call.1}
  #allocation0 [shape = 'u32[]', space=smem, size = 0x4, offset = 0x4, fixed_abs, tag = 'smem constant byte address 0x4 - core index']
  #allocation1 [shape = 'u32[144,128]{1,0:T(1,128)}', space=vmem, size = 0x12000, scoped, tag = 'internal scratch']
  %s0 = inlined_call_operand.hbm [shape: f32[16,128], index: 0, kind: input, shape index: {}]
  %s1 = inlined_call_operand.hbm [shape: f32[16,128], index: 1, kind: input, shape index: {}]
  %s2 = inlined_call_operand.hbm [shape: f32[8,128], index: 2, kind: output, shape index: {}]
  %s3 = sld [smem:[#allocation0]]
  $region30: #{tpu_custom_call.1} parent=0
    _
  %s5 = ssub.s32 1, %s3
  %s6 = scalar_select 0, %s5, %s3
  $region1: #{tpu_custom_call.1} parent=0
    #allocation2 [shape = 'u8[8192]{0}', space=vmem, size = 0x2000, scoped, tag = 'input window, operand 0, single buffered']
    #allocation3 [shape = 's32[1]{0}', space=sflag, size = 0x4, scoped, tag = 'scoped memory for tpu_custom_call.1']
    #allocation4 [shape = 's32[1]{0}', space=sflag, size = 0x4, scoped, tag = 'scoped memory for tpu_custom_call.1']
    #allocation5 [shape = 'u8[8192]{0}', space=vmem, size = 0x2000, scoped, tag = 'input window, operand 1, single buffered']
    #allocation6 [shape = 's32[1]{0}', space=sflag, size = 0x4, scoped, tag = 'scoped memory for tpu_custom_call.1']
    #allocation7 [shape = 'u8[4096]{0}', space=vmem, size = 0x1000, scoped, tag = 'output window, operand 0, single buffered']
    %7 = vsyncpa [#allocation3], 0
    %8 = vsyncpa [#allocation6], 0
    %9 = vsyncpa [#allocation4], 0
    // Predicated region
    $region2: #{tpu_custom_call.1} parent=1 // pred_check
      _
    $region3: #{tpu_custom_call.1} parent=1 // pred_check_branch
      %11 = sbr.rel (0) target = $region5
    $region4: #{tpu_custom_call.1} parent=1 // pred_region
      %s13 = ssub.s32 256, 256
      %14 = vsyncadd [#allocation3], %s13
      %s15 = sshll.u32 [#allocation2], 4
      %s16 = int_to_ptr.vmem [resolvable:$true] %s15
      %21 = dma.hbm_to_vmem [thread:$0]  %s0, 256, %s16, [#allocation3], 128, 128, 8
    $region5: #{tpu_custom_call.1} parent=1 // pred_fallthru
      _
    // Predicated region
    $region6: #{tpu_custom_call.1} parent=1 // pred_check
      _
    $region7: #{tpu_custom_call.1} parent=1 // pred_check_branch
      %23 = sbr.rel (0) target = $region9
    $region8: #{tpu_custom_call.1} parent=1 // pred_region
      %s25 = ssub.s32 256, 256
      %26 = vsyncadd [#allocation6], %s25
      %s27 = sshll.u32 [#allocation5], 4
      %s28 = int_to_ptr.vmem [resolvable:$true] %s27
      %33 = dma.hbm_to_vmem [thread:$0]  %s1, 256, %s28, [#allocation6], 128, 128, 8
    $region9: #{tpu_custom_call.1} parent=1 // pred_fallthru
      _
    // Predicated region
    $region10: #{tpu_custom_call.1} parent=1 // pred_check
      _
    $region11: #{tpu_custom_call.1} parent=1 // pred_check_branch
      %35 = sbr.rel (0) target = $region13
    $region12: #{tpu_custom_call.1} parent=1 // pred_region
      %36 = dma.done [#allocation3], 256
    $region13: #{tpu_custom_call.1} parent=1 // pred_fallthru
      _
    // Predicated region
    $region14: #{tpu_custom_call.1} parent=1 // pred_check
      _
    $region15: #{tpu_custom_call.1} parent=1 // pred_check_branch
      %38 = sbr.rel (0) target = $region17
    $region16: #{tpu_custom_call.1} parent=1 // pred_region
      %39 = dma.done [#allocation6], 256
    $region17: #{tpu_custom_call.1} parent=1 // pred_fallthru
      _
    %p40 = scmp.eq.s32.totalorder 0, 0
    // Predicated region
    $region18: #{tpu_custom_call.1} parent=1 // pred_check
      %p41 = pneg %p40
    $region19: #{tpu_custom_call.1} parent=1 // pred_check_branch
      %43 = sbr.rel (%p41) target = $region21
    $region20: #{tpu_custom_call.1} parent=1 // pred_region
      %44 = vst [vmem:[#allocation7] sm:$0xff] 0.0
    $region21: #{tpu_custom_call.1} parent=1 // pred_fallthru
      _
    %v45 = vld [vmem:[#allocation2] sm:$0xff]
    %v46 = vld [vmem:[#allocation2 + $0x8] sm:$0xff]
    %v47 = vld [vmem:[#allocation5] sm:$0xff]
    %v48 = vld [vmem:[#allocation5 + $0x8] sm:$0xff]
    %v49 = vsub.f32 %v45, %v47
    %v50 = vsub.f32 %v46, %v48
    %v51 = vmul.f32 %v49, %v49
    %v52 = vmul.f32 %v50, %v50
    %v53 = vld [vmem:[#allocation7] sm:$0xff]
    %v54 = vadd.f32 %v51, %v52
    %v55 = vadd.f32 %v53, %v54
    %56 = vst [vmem:[#allocation7] sm:$0xff] %v55
    // Predicated region
    $region22: #{tpu_custom_call.1} parent=1 // pred_check
      _
    $region23: #{tpu_custom_call.1} parent=1 // pred_check_branch
      %58 = sbr.rel (0) target = $region25
    $region24: #{tpu_custom_call.1} parent=1 // pred_region
      %s60 = ssub.s32 128, 128
      %61 = vsyncadd [#allocation4], %s60
      %s63 = sshll.u32 [#allocation7], 4
      %s64 = int_to_ptr.vmem [resolvable:$true] %s63
      %66 = dma.vmem_to_hbm [thread:$0]  %s64, 128, %s2, [#allocation4]
    $region25: #{tpu_custom_call.1} parent=1 // pred_fallthru
      _
    // Predicated region
    $region26: #{tpu_custom_call.1} parent=1 // pred_check
      _
    $region27: #{tpu_custom_call.1} parent=1 // pred_check_branch
      %68 = sbr.rel (0) target = $region29
    $region28: #{tpu_custom_call.1} parent=1 // pred_region
      %69 = dma.done [#allocation4], 128
    $region29: #{tpu_custom_call.1} parent=1 // pred_fallthru
      _
    %70 = vsyncpa [#allocation3], 1
    %71 = vsyncpa [#allocation6], 1
    %72 = vsyncpa [#allocation4], 1

</llo_original>
